<compile_context>
chip_gen: v7x
topology: tpu7x:2x2x1
jax: 0.10.0
libtpu: 0.0.40
codegen_flags: <defaults>
</compile_context>

<pallas_src>
import functools

import jax
import jax.numpy as jnp
from jax.experimental import pallas as pl
from jax.experimental.pallas import tpu as pltpu

# ---- small synthetic sizes (consistent with SD3's tail, scaled down) ----
B = 2            # batch
S = 64           # number of patch tokens
D = 128          # inner_dim (hidden)
PATCH = 2        # patch_size
OUT_CH = 16      # sd3.out_channels
P = PATCH * PATCH * OUT_CH   # proj_out output dim = 64
EPS = 1e-6
LANE = 128       # TPU lane width


def _sd3_tail_kernel(h_ref, t_ref, wa_ref, ba_ref, wp_ref, bp_ref, o_ref, *, d):
    # h_ref : (S, D)     f32   token tile for this grid step (tile == one batch row)
    # t_ref : (1, 1, D)  f32   this batch row's temb (selected by BlockSpec)
    # wa_ref: (D, 2D)    bf16  AdaLN linear weight (in,out layout)
    # ba_ref: (1, 2D)    f32   AdaLN linear bias
    # wp_ref: (D, Pp)    bf16  proj_out weight, zero-padded to lane-dense Pp
    # bp_ref: (1, Pp)    f32   proj_out bias, zero-padded
    # o_ref : (S, Pp)          lane-dense padded output tile

    # --- AdaLN conditioning: emb = Linear(silu(temb)) for this batch row only ---
    t = t_ref[0]                                          # (1, D) f32
    silu = t * jax.nn.sigmoid(t)                          # SiLU on VPU/EUP, f32
    emb = jnp.dot(silu.astype(jnp.bfloat16), wa_ref[...],
                  preferred_element_type=jnp.float32) + ba_ref[...]       # (1, 2D) f32
    scale = emb[:, :d]                                    # torch.chunk order
    shift = emb[:, d:]

    # --- LayerNorm (no affine, eps=1e-6) over last dim, f32 ---
    x = h_ref[...]                                        # (S, D)
    mean = jnp.mean(x, axis=-1, keepdims=True)
    cen = x - mean
    var = jnp.mean(cen * cen, axis=-1, keepdims=True)
    ln = cen * jax.lax.rsqrt(var + EPS)

    # --- modulate + proj_out (bf16 MXU operands, f32 accumulate) ---
    y = ln * (1.0 + scale) + shift                        # broadcast (1,D) over (S,D)
    out = jnp.dot(y.astype(jnp.bfloat16), wp_ref[...],
                  preferred_element_type=jnp.float32) + bp_ref[...]       # (S, Pp)
    o_ref[...] = out.astype(o_ref.dtype)


def sd3_tail(hidden_states, temb, w_ada, b_ada, w_proj, b_proj):
    Bb, Ss, Dd = hidden_states.shape
    Pp = w_proj.shape[1]
    Ppad = ((Pp + LANE - 1) // LANE) * LANE              # lane-dense output width

    # bf16 weights in HBM (halves weight traffic, native MXU rate); biases f32.
    wa = w_ada.astype(jnp.bfloat16)
    wp = jnp.zeros((Dd, Ppad), jnp.bfloat16).at[:, :Pp].set(w_proj.astype(jnp.bfloat16))
    bp = jnp.zeros((1, Ppad), jnp.float32).at[:, :Pp].set(b_proj.astype(jnp.float32))

    # Flatten batch into the token (M) axis; tiles align with batch rows.
    tokens = hidden_states.reshape(Bb * Ss, Dd)
    # temb as (B, 1, D): a (1,1,D) block's last-two dims equal the array's
    # last-two dims, so per-batch row selection is pure BlockSpec DMA.
    temb3 = temb.reshape(Bb, 1, Dd)

    # NOTE: at production SD3 sizes (D=1536, S~16K) add an S-tile grid axis and
    # set vmem_limit_bytes for v7x's 64 MiB VMEM; structure below is unchanged.
    out_flat = pl.pallas_call(
        functools.partial(_sd3_tail_kernel, d=Dd),
        out_shape=jax.ShapeDtypeStruct((Bb * Ss, Ppad), hidden_states.dtype),
        grid_spec=pltpu.PrefetchScalarGridSpec(
            num_scalar_prefetch=0,
            grid=(Bb,),                                   # one token tile (= one batch) per step
            in_specs=[
                pl.BlockSpec((Ss, Dd), lambda i: (i, 0)),        # token tile
                pl.BlockSpec((1, 1, Dd), lambda i: (i, 0, 0)),   # this batch's temb row
                pl.BlockSpec((Dd, 2 * Dd), lambda i: (0, 0)),    # AdaLN weight (bf16)
                pl.BlockSpec((1, 2 * Dd), lambda i: (0, 0)),     # AdaLN bias
                pl.BlockSpec((Dd, Ppad), lambda i: (0, 0)),      # proj_out weight (bf16, padded)
                pl.BlockSpec((1, Ppad), lambda i: (0, 0)),       # proj_out bias (padded)
            ],
            out_specs=pl.BlockSpec((Ss, Ppad), lambda i: (i, 0)),
        ),
        compiler_params=pltpu.CompilerParams(
            dimension_semantics=("parallel",)),           # independent steps -> both TCs on v7x
    )(tokens, temb3, wa, b_ada, wp, bp)

    return out_flat.reshape(Bb, Ss, Ppad)[:, :, :Pp]


def sd3_tail_ref(hidden_states, temb, w_ada, b_ada, w_proj, b_proj):
    """Pure-JAX f32 reference mirroring the PyTorch forward."""
    silu = temb * jax.nn.sigmoid(temb)
    emb = silu @ w_ada + b_ada[0]
    half = emb.shape[1] // 2
    scale, shift = emb[:, :half], emb[:, half:]
    mean = jnp.mean(hidden_states, axis=-1, keepdims=True)
    var = jnp.mean((hidden_states - mean) ** 2, axis=-1, keepdims=True)
    ln = (hidden_states - mean) / jnp.sqrt(var + EPS)
    y = ln * (1.0 + scale)[:, None, :] + shift[:, None, :]
    return y @ w_proj + b_proj[0]


if __name__ == "__main__":
    key = jax.random.PRNGKey(0)
    k_h, k_t, k_wa, k_ba, k_wp, k_bp = jax.random.split(key, 6)

    hidden_states = jax.random.normal(k_h, (B, S, D), jnp.float32)
    temb = jax.random.normal(k_t, (B, D), jnp.float32)

    # Deterministic synthetic parameters (shapes match the module's __init__).
    w_ada = jax.random.normal(k_wa, (D, 2 * D), jnp.float32) * 0.02   # AdaLN Linear(D, 2D)
    b_ada = jax.random.normal(k_ba, (1, 2 * D), jnp.float32) * 0.02
    w_proj = jax.random.normal(k_wp, (D, P), jnp.float32) * 0.02      # proj_out Linear(D, P)
    b_proj = jax.random.normal(k_bp, (1, P), jnp.float32) * 0.02

    out = sd3_tail(hidden_states, temb, w_ada, b_ada, w_proj, b_proj)
    out = jax.block_until_ready(out)

    ref = sd3_tail_ref(hidden_states, temb, w_ada, b_ada, w_proj, b_proj)
    assert out.shape == (B, S, P), out.shape
    # bf16 MXU operands vs f32 reference -> relaxed tolerance.
    assert jnp.allclose(out, ref, atol=2e-2, rtol=2e-2), (
        "mismatch vs reference, max abs err = %e" % float(jnp.max(jnp.abs(out - ref))))

    print("KERNEL_OK")
</pallas_src>

<mosaic_0001>
module attributes {stable_mosaic.version = 11 : i64} {
  func.func @_sd3_tail_kernel(%arg0: i32, %arg1: memref<64x128xf32, #tpu.memory_space<vmem>>, %arg2: memref<1x1x128xf32, #tpu.memory_space<vmem>>, %arg3: memref<128x256xbf16, #tpu.memory_space<vmem>>, %arg4: memref<1x256xf32, #tpu.memory_space<vmem>>, %arg5: memref<128x128xbf16, #tpu.memory_space<vmem>>, %arg6: memref<1x128xf32, #tpu.memory_space<vmem>>, %arg7: memref<64x128xf32, #tpu.memory_space<vmem>>) attributes {dimension_semantics = [#tpu.dimension_semantics<parallel>], iteration_bounds = array<i64: 2>, scalar_prefetch = 0 : i64, scratch_operands = 0 : i64, tpu.core_type = #tpu.core_type<tc>, window_params = [{transform_indices = @transform_0, window_bounds = array<i64: 64, 128>}, {transform_indices = @transform_1, window_bounds = array<i64: 1, 1, 128>}, {pipeline_mode = #tpu.pipeline_mode<synchronous>, transform_indices = @transform_2, window_bounds = array<i64: 128, 256>}, {pipeline_mode = #tpu.pipeline_mode<synchronous>, transform_indices = @transform_3, window_bounds = array<i64: 1, 256>}, {pipeline_mode = #tpu.pipeline_mode<synchronous>, transform_indices = @transform_4, window_bounds = array<i64: 128, 128>}, {pipeline_mode = #tpu.pipeline_mode<synchronous>, transform_indices = @transform_5, window_bounds = array<i64: 1, 128>}, {transform_indices = @transform_6, window_bounds = array<i64: 64, 128>}]} {
    %c0 = arith.constant 0 : index
    %c0_0 = arith.constant 0 : index
    %c0_1 = arith.constant 0 : index
    %0 = vector.load %arg2[%c0, %c0_0, %c0_1] : memref<1x1x128xf32, #tpu.memory_space<vmem>>, vector<1x1x128xf32>
    %1 = vector.shape_cast %0 : vector<1x1x128xf32> to vector<1x128xf32>
    %2 = arith.negf %1 : vector<1x128xf32>
    %3 = math.exp %2 : vector<1x128xf32>
    %cst = arith.constant 1.000000e+00 : f32
    %4 = vector.broadcast %cst : f32 to vector<1x128xf32>
    %5 = arith.addf %4, %3 : vector<1x128xf32>
    %6 = arith.divf %4, %5 : vector<1x128xf32>
    %7 = arith.mulf %1, %6 : vector<1x128xf32>
    %8 = arith.truncf %7 : vector<1x128xf32> to vector<1x128xbf16>
    %c0_2 = arith.constant 0 : index
    %c0_3 = arith.constant 0 : index
    %9 = vector.load %arg3[%c0_2, %c0_3] : memref<128x256xbf16, #tpu.memory_space<vmem>>, vector<128x256xbf16>
    %cst_4 = arith.constant dense<0.000000e+00> : vector<1x256xf32>
    %10 = tpu.matmul %8, %9, %cst_4 {dimension_numbers = #tpu.dot_dimension_numbers<[1], [0], [0], [1], [0, 0, 1, 1], [], []>} : vector<1x128xbf16>, vector<128x256xbf16>, vector<1x256xf32> -> vector<1x256xf32>
    %c0_5 = arith.constant 0 : index
    %c0_6 = arith.constant 0 : index
    %11 = vector.load %arg4[%c0_5, %c0_6] : memref<1x256xf32, #tpu.memory_space<vmem>>, vector<1x256xf32>
    %12 = arith.addf %10, %11 : vector<1x256xf32>
    %13 = vector.extract_strided_slice %12 {offsets = [0, 0], sizes = [1, 128], strides = [1, 1]} : vector<1x256xf32> to vector<1x128xf32>
    %14 = vector.extract_strided_slice %12 {offsets = [0, 128], sizes = [1, 128], strides = [1, 1]} : vector<1x256xf32> to vector<1x128xf32>
    %c0_7 = arith.constant 0 : index
    %c0_8 = arith.constant 0 : index
    %15 = vector.load %arg1[%c0_7, %c0_8] : memref<64x128xf32, #tpu.memory_space<vmem>>, vector<64x128xf32>
    %cst_9 = arith.constant dense<0.000000e+00> : vector<64xf32>
    %16 = vector.multi_reduction <add>, %15, %cst_9 [1] : vector<64x128xf32> to vector<64xf32>
    %17 = vector.shape_cast %16 : vector<64xf32> to vector<64x1xf32>
    %cst_10 = arith.constant 1.280000e+02 : f32
    %18 = vector.broadcast %cst_10 : f32 to vector<64x1xf32>
    %19 = arith.divf %17, %18 : vector<64x1xf32>
    %20 = vector.broadcast %19 : vector<64x1xf32> to vector<64x128xf32>
    %21 = arith.subf %15, %20 : vector<64x128xf32>
    %22 = arith.mulf %21, %21 : vector<64x128xf32>
    %cst_11 = arith.constant dense<0.000000e+00> : vector<64xf32>
    %23 = vector.multi_reduction <add>, %22, %cst_11 [1] : vector<64x128xf32> to vector<64xf32>
    %24 = vector.shape_cast %23 : vector<64xf32> to vector<64x1xf32>
    %cst_12 = arith.constant 1.280000e+02 : f32
    %25 = vector.broadcast %cst_12 : f32 to vector<64x1xf32>
    %26 = arith.divf %24, %25 : vector<64x1xf32>
    %cst_13 = arith.constant 9.99999997E-7 : f32
    %27 = vector.broadcast %cst_13 : f32 to vector<64x1xf32>
    %28 = arith.addf %26, %27 : vector<64x1xf32>
    %29 = math.rsqrt %28 : vector<64x1xf32>
    %30 = vector.broadcast %29 : vector<64x1xf32> to vector<64x128xf32>
    %31 = arith.mulf %21, %30 : vector<64x128xf32>
    %cst_14 = arith.constant 1.000000e+00 : f32
    %32 = vector.broadcast %cst_14 : f32 to vector<1x128xf32>
    %33 = arith.addf %32, %13 : vector<1x128xf32>
    %34 = vector.broadcast %33 : vector<1x128xf32> to vector<64x128xf32>
    %35 = arith.mulf %31, %34 : vector<64x128xf32>
    %36 = vector.broadcast %14 : vector<1x128xf32> to vector<64x128xf32>
    %37 = arith.addf %35, %36 : vector<64x128xf32>
    %38 = arith.truncf %37 : vector<64x128xf32> to vector<64x128xbf16>
    %c0_15 = arith.constant 0 : index
    %c0_16 = arith.constant 0 : index
    %39 = vector.load %arg5[%c0_15, %c0_16] : memref<128x128xbf16, #tpu.memory_space<vmem>>, vector<128x128xbf16>
    %cst_17 = arith.constant dense<0.000000e+00> : vector<64x128xf32>
    %40 = tpu.matmul %38, %39, %cst_17 {dimension_numbers = #tpu.dot_dimension_numbers<[1], [0], [0], [1], [0, 0, 1, 1], [], []>} : vector<64x128xbf16>, vector<128x128xbf16>, vector<64x128xf32> -> vector<64x128xf32>
    %c0_18 = arith.constant 0 : index
    %c0_19 = arith.constant 0 : index
    %41 = vector.load %arg6[%c0_18, %c0_19] : memref<1x128xf32, #tpu.memory_space<vmem>>, vector<1x128xf32>
    %42 = vector.broadcast %41 : vector<1x128xf32> to vector<64x128xf32>
    %43 = arith.addf %40, %42 : vector<64x128xf32>
    %c0_20 = arith.constant 0 : index
    %c0_21 = arith.constant 0 : index
    %44 = vector.load %arg7[%c0_20, %c0_21] : memref<64x128xf32, #tpu.memory_space<vmem>>, vector<64x128xf32>
    tpu.vector_store %arg7[%c0_20, %c0_21], %43 {strides = array<i32>} : memref<64x128xf32, #tpu.memory_space<vmem>>, vector<64x128xf32>,
    return
  }
  func.func @transform_0(%arg0: i32) -> (i32, i32) {
    %c0_i32 = arith.constant 0 : i32
    %c0_i32_0 = arith.constant 0 : i32
    return %arg0, %c0_i32 : i32, i32
  }
  func.func @transform_1(%arg0: i32) -> (i32, i32, i32) {
    %c0_i32 = arith.constant 0 : i32
    %c0_i32_0 = arith.constant 0 : i32
    %c0_i32_1 = arith.constant 0 : i32
    return %arg0, %c0_i32, %c0_i32_0 : i32, i32, i32
  }
  func.func @transform_2(%arg0: i32) -> (i32, i32) {
    %c0_i32 = arith.constant 0 : i32
    %c0_i32_0 = arith.constant 0 : i32
    %c0_i32_1 = arith.constant 0 : i32
    return %c0_i32, %c0_i32_0 : i32, i32
  }
  func.func @transform_3(%arg0: i32) -> (i32, i32) {
    %c0_i32 = arith.constant 0 : i32
    %c0_i32_0 = arith.constant 0 : i32
    %c0_i32_1 = arith.constant 0 : i32
    return %c0_i32, %c0_i32_0 : i32, i32
  }
  func.func @transform_4(%arg0: i32) -> (i32, i32) {
    %c0_i32 = arith.constant 0 : i32
    %c0_i32_0 = arith.constant 0 : i32
    %c0_i32_1 = arith.constant 0 : i32
    return %c0_i32, %c0_i32_0 : i32, i32
  }
  func.func @transform_5(%arg0: i32) -> (i32, i32) {
    %c0_i32 = arith.constant 0 : i32
    %c0_i32_0 = arith.constant 0 : i32
    %c0_i32_1 = arith.constant 0 : i32
    return %c0_i32, %c0_i32_0 : i32, i32
  }
  func.func @transform_6(%arg0: i32) -> (i32, i32) {
    %c0_i32 = arith.constant 0 : i32
    %c0_i32_0 = arith.constant 0 : i32
    return %arg0, %c0_i32 : i32, i32
  }
}

</mosaic_0001>

<llo_original>
// kernel: tpu_custom_call.1
$region0: #{tpu_custom_call.1}
  #allocation0 [shape = 'u32[]', space=smem, size = 0x4, offset = 0x4, fixed_abs, tag = 'smem constant byte address 0x4 - core index']
  #allocation1 [shape = 'u32[144,128]{1,0:T(1,128)}', space=vmem, size = 0x12000, scoped, tag = 'internal scratch']
  %s0 = inlined_call_operand.hbm [shape: f32[128,128], index: 0, kind: input, shape index: {}]
  %s1 = inlined_call_operand.vmem [shape: f32[2,1,128], index: 1, kind: input, shape index: {}]
  %s2 = inlined_call_operand.hbm [shape: bf16[128,256], index: 2, kind: input, shape index: {}]
  %s3 = inlined_call_operand.vmem [shape: f32[1,256], index: 3, kind: input, shape index: {}]
  %s4 = inlined_call_operand.hbm [shape: bf16[128,128], index: 4, kind: input, shape index: {}]
  %s5 = inlined_call_operand.vmem [shape: f32[1,128], index: 5, kind: input, shape index: {}]
  %s6 = inlined_call_operand.hbm [shape: f32[128,128], index: 6, kind: output, shape index: {}]
  %s7 = sld [smem:[#allocation0]]
  $region69: #{tpu_custom_call.1} parent=0
    _
  %s9 = ssub.s32 1, %s7
  %s10 = scalar_select 0, %s9, %s7
  $region1: #{tpu_custom_call.1} parent=0
    #allocation2 [shape = 'u8[65536]{0}', space=vmem, size = 0x10000, scoped, tag = 'input window, operand 0']
    #allocation3 [shape = 's32[2]{0}', space=sflag, size = 0x8, scoped, tag = 'scoped memory for tpu_custom_call.1']
    #allocation4 [shape = 's32[2]{0}', space=sflag, size = 0x8, scoped, tag = 'scoped memory for tpu_custom_call.1']
    #allocation5 [shape = 'u8[65536]{0}', space=vmem, size = 0x10000, scoped, tag = 'input window, operand 2, single buffered']
    #allocation6 [shape = 's32[1]{0}', space=sflag, size = 0x4, scoped, tag = 'scoped memory for tpu_custom_call.1']
    #allocation7 [shape = 'u8[32768]{0}', space=vmem, size = 0x8000, scoped, tag = 'input window, operand 4, single buffered']
    #allocation8 [shape = 'u8[65536]{0}', space=vmem, size = 0x10000, scoped, tag = 'output window, operand 0']
    %11 = vsyncpa [#allocation3], 0
    %s12 = scalar_lea.sflag [#allocation3], 1
    %13 = vsyncpa %s12, 0
    %14 = vsyncpa [#allocation6], 0
    %15 = vsyncpa [#allocation4], 0
    %s16 = scalar_lea.sflag [#allocation4], 1
    %17 = vsyncpa %s16, 0
    loop: start=0, step=1, limit=4
    $region2: #{tpu_custom_call.1} parent=1 // loop_pre_header
      _
    $region3: #{tpu_custom_call.1} parent=1 // loop_header
      %s19 = sphi 0, %s23
      %p20 = scmp.ge.s32.totalorder %s19, 4
      %s29 = sphi 0, %s31
      %s32 = sphi 0, %s29
      %s33 = sphi 0, %s32
      %s49 = sphi 0, %s33
      %s55 = sphi 0, %s57
      %s58 = sphi 0, %s55
      %s59 = sphi 0, %s58
      %s75 = sphi 0, %s59
      %s79 = sphi 0, %s79
      %s81 = sphi 0, %s79
      %s82 = sphi 0, %s81
      %s96 = sphi 0, %s82
      %s100 = sphi 0, %s100
      %s102 = sphi 0, %s100
      %s103 = sphi 0, %s102
      %s117 = sphi 0, %s103
      %s121 = sphi 0, %s121
      %s123 = sphi 0, %s121
      %s124 = sphi 0, %s123
      %s138 = sphi 0, %s124
      %s142 = sphi 0, %s142
      %s144 = sphi 0, %s142
      %s145 = sphi 0, %s144
      %s159 = sphi 0, %s145
      %s165 = sphi 0, %s167
      %s168 = sphi 0, %s165
      %s169 = sphi 0, %s168
      %s185 = sphi 0, %s169
    $region4: #{tpu_custom_call.1} parent=1 // loop_header_branch
      %22 = sbr.rel (%p20) target = $region8
    $region5: #{tpu_custom_call.1} parent=1 // loop_body
      %s24 = ssub.s32 %s19, 1
      %s25 = ssub.s32 %s19, 2
      %s26 = sadd.s32 %s19, 1
      %s27 = ssub.s32 %s19, %s26
      %p28 = scmp.eq.s32.totalorder %s27, 0
      %s30 = sadd.s32 %s29, 1
      %s31 = scalar_select %p28, %s29, %s30
      %p34 = pneg %p28
      %p35 = scmp.eq.s32.totalorder %s19, 1
      %p36 = por %p34, %p35
      %p37 = scmp.ne.s32.totalorder %s29, %s32
      %p38 = scmp.eq.s32.totalorder %s19, 0
      %p39 = por %p37, %p38
      %p40 = scmp.ne.s32.totalorder %s29, %s32
      %p41 = scmp.eq.s32.totalorder %s24, 1
      %p42 = por %p40, %p41
      %p43 = scmp.ne.s32.totalorder %s32, %s33
      %p44 = scmp.eq.s32.totalorder %s24, 0
      %p45 = por %p43, %p44
      %p46 = scmp.ne.s32.totalorder %s32, %s33
      %p47 = scmp.eq.s32.totalorder %s25, 1
      %p48 = por %p46, %p47
      %p50 = scmp.ne.s32.totalorder %s33, %s49
      %p51 = scmp.eq.s32.totalorder %s25, 0
      %p52 = por %p50, %p51
      %s53 = ssub.s32 %s19, %s26
      %p54 = scmp.eq.s32.totalorder %s53, 0
      %s56 = sadd.s32 %s55, 1
      %s57 = scalar_select %p54, %s55, %s56
      %p60 = pneg %p54
      %p61 = scmp.eq.s32.totalorder %s19, 1
      %p62 = por %p60, %p61
      %p63 = scmp.ne.s32.totalorder %s55, %s58
      %p64 = scmp.eq.s32.totalorder %s19, 0
      %p65 = por %p63, %p64
      %p66 = scmp.ne.s32.totalorder %s55, %s58
      %p67 = scmp.eq.s32.totalorder %s24, 1
      %p68 = por %p66, %p67
      %p69 = scmp.ne.s32.totalorder %s58, %s59
      %p70 = scmp.eq.s32.totalorder %s24, 0
      %p71 = por %p69, %p70
      %p72 = scmp.ne.s32.totalorder %s58, %s59
      %p73 = scmp.eq.s32.totalorder %s25, 1
      %p74 = por %p72, %p73
      %p76 = scmp.ne.s32.totalorder %s59, %s75
      %p77 = scmp.eq.s32.totalorder %s25, 0
      %p78 = por %p76, %p77
      %s80 = sadd.s32 %s79, 1
      %p83 = scmp.eq.s32.totalorder %s19, 1
      %p84 = scmp.ne.s32.totalorder %s79, %s81
      %p85 = scmp.eq.s32.totalorder %s19, 0
      %p86 = por %p84, %p85
      %p87 = scmp.ne.s32.totalorder %s79, %s81
      %p88 = scmp.eq.s32.totalorder %s24, 1
      %p89 = por %p87, %p88
      %p90 = scmp.ne.s32.totalorder %s81, %s82
      %p91 = scmp.eq.s32.totalorder %s24, 0
      %p92 = por %p90, %p91
      %p93 = scmp.ne.s32.totalorder %s81, %s82
      %p94 = scmp.eq.s32.totalorder %s25, 1
      %p95 = por %p93, %p94
      %p97 = scmp.ne.s32.totalorder %s82, %s96
      %p98 = scmp.eq.s32.totalorder %s25, 0
      %p99 = por %p97, %p98
      %s101 = sadd.s32 %s100, 1
      %p104 = scmp.eq.s32.totalorder %s19, 1
      %p105 = scmp.ne.s32.totalorder %s100, %s102
      %p106 = scmp.eq.s32.totalorder %s19, 0
      %p107 = por %p105, %p106
      %p108 = scmp.ne.s32.totalorder %s100, %s102
      %p109 = scmp.eq.s32.totalorder %s24, 1
      %p110 = por %p108, %p109
      %p111 = scmp.ne.s32.totalorder %s102, %s103
      %p112 = scmp.eq.s32.totalorder %s24, 0
      %p113 = por %p111, %p112
      %p114 = scmp.ne.s32.totalorder %s102, %s103
      %p115 = scmp.eq.s32.totalorder %s25, 1
      %p116 = por %p114, %p115
      %p118 = scmp.ne.s32.totalorder %s103, %s117
      %p119 = scmp.eq.s32.totalorder %s25, 0
      %p120 = por %p118, %p119
      %s122 = sadd.s32 %s121, 1
      %p125 = scmp.eq.s32.totalorder %s19, 1
      %p126 = scmp.ne.s32.totalorder %s121, %s123
      %p127 = scmp.eq.s32.totalorder %s19, 0
      %p128 = por %p126, %p127
      %p129 = scmp.ne.s32.totalorder %s121, %s123
      %p130 = scmp.eq.s32.totalorder %s24, 1
      %p131 = por %p129, %p130
      %p132 = scmp.ne.s32.totalorder %s123, %s124
      %p133 = scmp.eq.s32.totalorder %s24, 0
      %p134 = por %p132, %p133
      %p135 = scmp.ne.s32.totalorder %s123, %s124
      %p136 = scmp.eq.s32.totalorder %s25, 1
      %p137 = por %p135, %p136
      %p139 = scmp.ne.s32.totalorder %s124, %s138
      %p140 = scmp.eq.s32.totalorder %s25, 0
      %p141 = por %p139, %p140
      %s143 = sadd.s32 %s142, 1
      %p146 = scmp.eq.s32.totalorder %s19, 1
      %p147 = scmp.ne.s32.totalorder %s142, %s144
      %p148 = scmp.eq.s32.totalorder %s19, 0
      %p149 = por %p147, %p148
      %p150 = scmp.ne.s32.totalorder %s142, %s144
      %p151 = scmp.eq.s32.totalorder %s24, 1
      %p152 = por %p150, %p151
      %p153 = scmp.ne.s32.totalorder %s144, %s145
      %p154 = scmp.eq.s32.totalorder %s24, 0
      %p155 = por %p153, %p154
      %p156 = scmp.ne.s32.totalorder %s144, %s145
      %p157 = scmp.eq.s32.totalorder %s25, 1
      %p158 = por %p156, %p157
      %p160 = scmp.ne.s32.totalorder %s145, %s159
      %p161 = scmp.eq.s32.totalorder %s25, 0
      %p162 = por %p160, %p161
      %s163 = ssub.s32 %s19, %s26
      %p164 = scmp.eq.s32.totalorder %s163, 0
      %s166 = sadd.s32 %s165, 1
      %s167 = scalar_select %p164, %s165, %s166
      %p170 = pneg %p164
      %p171 = scmp.eq.s32.totalorder %s19, 1
      %p172 = por %p170, %p171
      %p173 = scmp.ne.s32.totalorder %s165, %s168
      %p174 = scmp.eq.s32.totalorder %s19, 0
      %p175 = por %p173, %p174
      %p176 = scmp.ne.s32.totalorder %s165, %s168
      %p177 = scmp.eq.s32.totalorder %s24, 1
      %p178 = por %p176, %p177
      %p179 = scmp.ne.s32.totalorder %s168, %s169
      %p180 = scmp.eq.s32.totalorder %s24, 0
      %p181 = por %p179, %p180
      %p182 = scmp.ne.s32.totalorder %s168, %s169
      %p183 = scmp.eq.s32.totalorder %s25, 1
      %p184 = por %p182, %p183
      %p186 = scmp.ne.s32.totalorder %s169, %s185
      %p187 = scmp.eq.s32.totalorder %s25, 0
      %p188 = por %p186, %p187
      %p189 = scmp.le.s32.totalorder 1, %s19
      %p190 = scmp.lt.s32.totalorder %s19, 3
      %p191 = pnand %p189, %p190
      %p192 = pneg %p191
      // Predicated region
      $region9: #{tpu_custom_call.1} parent=5 // pred_check
        _
      $region10: #{tpu_custom_call.1} parent=5 // pred_check_branch
        %194 = sbr.rel (%p191) target = $region12
      $region11: #{tpu_custom_call.1} parent=5 // pred_region
        %s195 = ssub.s32 %s19, 1
        // Predicated region
        $region13: #{tpu_custom_call.1} parent=11 // pred_check
          %p196 = pneg %p92
        $region14: #{tpu_custom_call.1} parent=11 // pred_check_branch
          %198 = sbr.rel (%p196) target = $region16
        $region15: #{tpu_custom_call.1} parent=11 // pred_region
          %s200 = ssub.s32 2048, 2048
          %201 = vsyncadd [#allocation6], %s200
          %s202 = sshll.u32 [#allocation5], 4
          %s203 = int_to_ptr.vmem [resolvable:$true] %s202
          %208 = dma.hbm_to_vmem [thread:$0]  %s2, 2048, %s203, [#allocation6], 128, 128, 8
        $region16: #{tpu_custom_call.1} parent=11 // pred_fallthru
          _
        // Predicated region
        $region17: #{tpu_custom_call.1} parent=11 // pred_check
          %p209 = pneg %p113
        $region18: #{tpu_custom_call.1} parent=11 // pred_check_branch
          %211 = sbr.rel (%p209) target = $region20
        $region19: #{tpu_custom_call.1} parent=11 // pred_region
          _
        $region20: #{tpu_custom_call.1} parent=11 // pred_fallthru
          _
        // Predicated region
        $region21: #{tpu_custom_call.1} parent=11 // pred_check
          %p212 = pneg %p134
        $region22: #{tpu_custom_call.1} parent=11 // pred_check_branch
          %214 = sbr.rel (%p212) target = $region24
        $region23: #{tpu_custom_call.1} parent=11 // pred_region
          %s216 = ssub.s32 1024, 1024
          %217 = vsyncadd [#allocation6], %s216
          %s218 = sshll.u32 [#allocation7], 4
          %s219 = int_to_ptr.vmem [resolvable:$true] %s218
          %224 = dma.hbm_to_vmem [thread:$0]  %s4, 1024, %s219, [#allocation6], 64, 64, 4
        $region24: #{tpu_custom_call.1} parent=11 // pred_fallthru
          _
        // Predicated region
        $region25: #{tpu_custom_call.1} parent=11 // pred_check
          %p225 = pneg %p155
        $region26: #{tpu_custom_call.1} parent=11 // pred_check_branch
          %227 = sbr.rel (%p225) target = $region28
        $region27: #{tpu_custom_call.1} parent=11 // pred_region
          _
        $region28: #{tpu_custom_call.1} parent=11 // pred_fallthru
          _
      $region12: #{tpu_custom_call.1} parent=5 // pred_fallthru
        _
      %p228 = scmp.lt.s32.totalorder %s19, 2
      // Predicated region
      $region29: #{tpu_custom_call.1} parent=5 // pred_check
        %p229 = pneg %p228
      $region30: #{tpu_custom_call.1} parent=5 // pred_check_branch
        %231 = sbr.rel (%p229) target = $region32
      $region31: #{tpu_custom_call.1} parent=5 // pred_region
        // Predicated region
        $region33: #{tpu_custom_call.1} parent=31 // pred_check
          %p232 = pneg %p39
        $region34: #{tpu_custom_call.1} parent=31 // pred_check_branch
          %234 = sbr.rel (%p232) target = $region36
        $region35: #{tpu_custom_call.1} parent=31 // pred_region
          %s235 = sand.u32 %s29, 1
          %s236 = scalar_lea.sflag [#allocation3], %s235
          %s237 = sand.u32 %s29, 1
          %s238 = smul.addr %s237, 64
          %s239 = scalar_lea.vmem [#allocation2], %s238
          %s240 = smul.u32 8, %s19
          %s242 = ssub.s32 1024, 1024
          %243 = vsyncadd %s236, %s242
          %s244 = smul.addr %s240, 128
          %s245 = scalar_lea.hbm %s0, %s244
          %s246 = sshll.u32 %s239, 4
          %s247 = int_to_ptr.vmem [resolvable:$true] %s246
          %252 = dma.hbm_to_vmem [thread:$0]  %s245, 1024, %s247, %s236, 128, 128, 8
        $region36: #{tpu_custom_call.1} parent=31 // pred_fallthru
          _
        // Predicated region
        $region37: #{tpu_custom_call.1} parent=31 // pred_check
          %p253 = pneg %p65
        $region38: #{tpu_custom_call.1} parent=31 // pred_check_branch
          %255 = sbr.rel (%p253) target = $region40
        $region39: #{tpu_custom_call.1} parent=31 // pred_region
          %p256 = scmp.lt.s32.totalorder %s19, 1
          %s257 = scalar_select %p256, %s19, 1
          %s258 = scalar_lea.vmem %s1, %s257
        $region40: #{tpu_custom_call.1} parent=31 // pred_fallthru
          _
      $region32: #{tpu_custom_call.1} parent=5 // pred_fallthru
        _
      %p259 = scmp.le.s32.totalorder 1, %s19
      %p260 = scmp.lt.s32.totalorder %s19, 3
      %p261 = pnand %p259, %p260
      %p262 = pneg %p261
      // Predicated region
      $region41: #{tpu_custom_call.1} parent=5 // pred_check
        _
      $region42: #{tpu_custom_call.1} parent=5 // pred_check_branch
        %264 = sbr.rel (%p261) target = $region44
      $region43: #{tpu_custom_call.1} parent=5 // pred_region
        %s265 = ssub.s32 %s19, 1
        %s266 = sand.u32 %s32, 1
        %s267 = scalar_lea.sflag [#allocation3], %s266
        %s268 = sand.u32 %s32, 1
        %s269 = smul.addr %s268, 64
        %s270 = scalar_lea.vmem [#allocation2], %s269
        // Predicated region
        $region45: #{tpu_custom_call.1} parent=43 // pred_check
          %p271 = pneg %p45
        $region46: #{tpu_custom_call.1} parent=43 // pred_check_branch
          %273 = sbr.rel (%p271) target = $region48
        $region47: #{tpu_custom_call.1} parent=43 // pred_region
          %274 = dma.done %s267, 1024
        $region48: #{tpu_custom_call.1} parent=43 // pred_fallthru
          _
        // Predicated region
        $region49: #{tpu_custom_call.1} parent=43 // pred_check
          %p275 = pneg %p92
        $region50: #{tpu_custom_call.1} parent=43 // pred_check_branch
          %277 = sbr.rel (%p275) target = $region52
        $region51: #{tpu_custom_call.1} parent=43 // pred_region
          %278 = dma.done [#allocation6], 2048
        $region52: #{tpu_custom_call.1} parent=43 // pred_fallthru
          _
        // Predicated region
        $region53: #{tpu_custom_call.1} parent=43 // pred_check
          %p279 = pneg %p134
        $region54: #{tpu_custom_call.1} parent=43 // pred_check_branch
          %281 = sbr.rel (%p279) target = $region56
        $region55: #{tpu_custom_call.1} parent=43 // pred_region
          %282 = dma.done [#allocation6], 1024
        $region56: #{tpu_custom_call.1} parent=43 // pred_fallthru
          _
        %s283 = sand.u32 %s32, 1
        %s284 = scalar_lea.sflag [#allocation3], %s283
        %s285 = sand.u32 %s32, 1
        %s286 = smul.addr %s285, 64
        %s287 = scalar_lea.vmem [#allocation2], %s286
        %p288 = pneg %p45
        %p289 = pneg %p42
        %p290 = scmp.lt.s32.totalorder %s24, 1
        %s291 = scalar_select %p290, %s24, 1
        %s292 = scalar_lea.vmem %s1, %s291
        %p293 = pneg %p71
        %p294 = pneg %p68
        %p295 = pneg %p92
        %p296 = pneg %p89
        %p297 = pneg %p113
        %p298 = pneg %p110
        %p299 = pneg %p134
        %p300 = pneg %p131
        %p301 = pneg %p155
        %p302 = pneg %p152
        %p303 = pneg %p181
        %p304 = pneg %p178
        %s305 = sand.u32 %s168, 1
        %s306 = scalar_lea.sflag [#allocation4], %s305
        %s307 = sand.u32 %s168, 1
        %s308 = smul.addr %s307, 64
        %s309 = scalar_lea.vmem [#allocation8], %s308
        %s310 = smul.u32 8, %s24
        %p311 = scmp.lt.s32.totalorder %s24, 1
        %s312 = scalar_select %p311, %s24, 1
        %s313 = scalar_lea.vmem %s1, %s312
        %s314 = smul.u32 8, %s24
        %v316 = vld [vmem:[%s313] sm:$0x1]
        %v317 = vxor.u32 %v316, 2147483648
        %v318 = vmul.f32 %v317, 1.442695
        %v319 = vpow.pop %v318
        %v320 = vadd.f32 %v319, 1.0
        %v321 = vrcp.pop %v320
        %v322 = vmul.f32 1.0, %v321
        %v323 = vmul.f32 %v316, %v322
        %v324 = vpack.c.bf16 %v323, %v323
        %v325 = vld [vmem:[#allocation5] sm:$0xff]
        %v326 = vld [vmem:[#allocation5 + $0x8] sm:$0xff]
        %v327 = vld [vmem:[#allocation5 + $0x10] sm:$0xff]
        %v328 = vld [vmem:[#allocation5 + $0x18] sm:$0xff]
        %v329 = vld [vmem:[#allocation5 + $0x20] sm:$0xff]
        %v330 = vld [vmem:[#allocation5 + $0x28] sm:$0xff]
        %v331 = vld [vmem:[#allocation5 + $0x30] sm:$0xff]
        %v332 = vld [vmem:[#allocation5 + $0x38] sm:$0xff]
        %v333 = vld [vmem:[#allocation5 + $0x40] sm:$0xff]
        %v334 = vld [vmem:[#allocation5 + $0x48] sm:$0xff]
        %v335 = vld [vmem:[#allocation5 + $0x50] sm:$0xff]
        %v336 = vld [vmem:[#allocation5 + $0x58] sm:$0xff]
        %v337 = vld [vmem:[#allocation5 + $0x60] sm:$0xff]
        %v338 = vld [vmem:[#allocation5 + $0x68] sm:$0xff]
        %v339 = vld [vmem:[#allocation5 + $0x70] sm:$0xff]
        %v340 = vld [vmem:[#allocation5 + $0x78] sm:$0xff]
        %v341 = vld [vmem:[%s3] sm:$0x3]
        %v358 = vunpack.c.l.b16 %v325
        %v359 = vunpack.c.h.b16 %v325
        %v360 = vunpack.c.l.b16 %v326
        %v361 = vunpack.c.h.b16 %v326
        %v362 = vunpack.c.l.b16 %v327
        %v363 = vunpack.c.h.b16 %v327
        %v364 = vunpack.c.l.b16 %v328
        %v365 = vunpack.c.h.b16 %v328
        %v366 = vunpack.c.l.b16 %v329
        %v367 = vunpack.c.h.b16 %v329
        %v368 = vunpack.c.l.b16 %v330
        %v369 = vunpack.c.h.b16 %v330
        %v370 = vunpack.c.l.b16 %v331
        %v371 = vunpack.c.h.b16 %v331
        %v372 = vunpack.c.l.b16 %v332
        %v373 = vunpack.c.h.b16 %v332
        %v374 = vunpack.c.l.b16 %v333
        %v375 = vunpack.c.h.b16 %v333
        %v376 = vunpack.c.l.b16 %v334
        %v377 = vunpack.c.h.b16 %v334
        %v378 = vunpack.c.l.b16 %v335
        %v379 = vunpack.c.h.b16 %v335
        %v380 = vunpack.c.l.b16 %v336
        %v381 = vunpack.c.h.b16 %v336
        %v382 = vunpack.c.l.b16 %v337
        %v383 = vunpack.c.h.b16 %v337
        %v384 = vunpack.c.l.b16 %v338
        %v385 = vunpack.c.h.b16 %v338
        %v386 = vunpack.c.l.b16 %v339
        %v387 = vunpack.c.h.b16 %v339
        %v388 = vunpack.c.l.b16 %v340
        %v389 = vunpack.c.h.b16 %v340
        %v390 = vpack.c.b16 %v360, %v358
        %v391 = vpack.c.b16 %v361, %v359
        %v392 = vpack.c.b16 %v364, %v362
        %v393 = vpack.c.b16 %v365, %v363
        %v394 = vpack.c.b16 %v368, %v366
        %v395 = vpack.c.b16 %v369, %v367
        %v396 = vpack.c.b16 %v372, %v370
        %v397 = vpack.c.b16 %v373, %v371
        %v398 = vpack.c.b16 %v376, %v374
        %v399 = vpack.c.b16 %v377, %v375
        %v400 = vpack.c.b16 %v380, %v378
        %v401 = vpack.c.b16 %v381, %v379
        %v402 = vpack.c.b16 %v384, %v382
        %v403 = vpack.c.b16 %v385, %v383
        %v404 = vpack.c.b16 %v388, %v386
        %v405 = vpack.c.b16 %v389, %v387
        %v423 = vlaneseq
        %v424 = vshrl.u32 %v423, 7
        %v425 = vsub.s32 0, %v424
        %v426 = vrot.slane %v341, %v425
        %v427 = vlaneseq
        %v428 = vshrl.u32 %v427, 7
        %v429 = vsub.s32 1, %v428
        %v430 = vrot.slane %v341, %v429
        %433 = vmatprep.subr.bf16.mxu0 %v391
        %434 = vmatpush1.bf16.msra.mxu0 %v390
        %435 = vmatprep.subr.bf16.mxu0 %v393
        %436 = vmatpush1.bf16.msra.mxu0 %v392
        %437 = vmatprep.subr.bf16.mxu0 %v395
        %438 = vmatpush1.bf16.msra.mxu0 %v394
        %439 = vmatprep.subr.bf16.mxu0 %v397
        %440 = vmatpush1.bf16.msra.mxu0 %v396
        %441 = vmatprep.subr.bf16.mxu0 %v399
        %442 = vmatpush1.bf16.msra.mxu0 %v398
        %443 = vmatprep.subr.bf16.mxu0 %v401
        %444 = vmatpush1.bf16.msra.mxu0 %v400
        %445 = vmatprep.subr.bf16.mxu0 %v403
        %446 = vmatpush1.bf16.msra.mxu0 %v402
        %447 = vmatprep.subr.bf16.mxu0 %v405
        %448 = vmatpush1.bf16.msra.mxu0 %v404
        %449 = vmatprep.subr.bf16.mxu0 0
        %450 = vmatpush1.bf16.msra.mxu0 0
        %451 = vmatprep.subr.bf16.mxu0 0
        %452 = vmatpush1.bf16.msra.mxu0 0
        %453 = vmatprep.subr.bf16.mxu0 0
        %454 = vmatpush1.bf16.msra.mxu0 0
        %455 = vmatprep.subr.bf16.mxu0 0
        %456 = vmatpush1.bf16.msra.mxu0 0
        %457 = vmatprep.subr.bf16.mxu0 0
        %458 = vmatpush1.bf16.msra.mxu0 0
        %459 = vmatprep.subr.bf16.mxu0 0
        %460 = vmatpush1.bf16.msra.mxu0 0
        %461 = vmatprep.subr.bf16.mxu0 0
        %462 = vmatpush1.bf16.msra.mxu0 0
        %463 = vmatprep.subr.bf16.mxu0 0
        %464 = vmatpush1.bf16.msra.mxu0 0
        %465 = vmatprep.mubr.bf16.mxu0 0
        %466 = vmatmul.mubr.bf16.gmra.mrb[0].mxu0 %v324
        %v467 = vpop.f32.mrb[0].mxu0
        %v468 = vadd.f32 %v426, %v467
        %v469 = vpop.f32.mrb[0].mxu0
        %v470 = vadd.f32 %v430, %v469
        %v471 = vpop.f32.mrb[0].mxu0
        %v472 = vpop.f32.mrb[0].mxu0
        %473 = vdwg.mxu0
        %v474 = vld [vmem:[%s270] sm:$0xff]
        %v475 = vld [vmem:[%s270 + $0x8] sm:$0xff]
        %v476 = vld [vmem:[%s270 + $0x10] sm:$0xff]
        %v477 = vld [vmem:[%s270 + $0x18] sm:$0xff]
        %v478 = vld [vmem:[%s270 + $0x20] sm:$0xff]
        %v479 = vld [vmem:[%s270 + $0x28] sm:$0xff]
        %v480 = vld [vmem:[%s270 + $0x30] sm:$0xff]
        %v481 = vld [vmem:[%s270 + $0x38] sm:$0xff]
        %482 = vadd.xlane.f32.xlu0 %v474
        %v483 = vpop.xlane.xlu0 %482
        %484 = vadd.xlane.f32.xlu0 %v475
        %v485 = vpop.xlane.xlu0 %484
        %486 = vadd.xlane.f32.xlu0 %v476
        %v487 = vpop.xlane.xlu0 %486
        %488 = vadd.xlane.f32.xlu0 %v477
        %v489 = vpop.xlane.xlu0 %488
        %490 = vadd.xlane.f32.xlu0 %v478
        %v491 = vpop.xlane.xlu0 %490
        %492 = vadd.xlane.f32.xlu0 %v479
        %v493 = vpop.xlane.xlu0 %492
        %494 = vadd.xlane.f32.xlu0 %v480
        %v495 = vpop.xlane.xlu0 %494
        %496 = vadd.xlane.f32.xlu0 %v481
        %v497 = vpop.xlane.xlu0 %496
        %v498 = vrcp.pop 128.0
        %v499 = vmul.f32 %v483, %v498
        %v500 = vmul.f32 %v485, %v498
        %v501 = vmul.f32 %v487, %v498
        %v502 = vmul.f32 %v489, %v498
        %v503 = vmul.f32 %v491, %v498
        %v504 = vmul.f32 %v493, %v498
        %v505 = vmul.f32 %v495, %v498
        %v506 = vmul.f32 %v497, %v498
        %v507 = vsub.f32 %v474, %v499
        %v508 = vsub.f32 %v475, %v500
        %v509 = vsub.f32 %v476, %v501
        %v510 = vsub.f32 %v477, %v502
        %v511 = vsub.f32 %v478, %v503
        %v512 = vsub.f32 %v479, %v504
        %v513 = vsub.f32 %v480, %v505
        %v514 = vsub.f32 %v481, %v506
        %v515 = vmul.f32 %v507, %v507
        %v516 = vmul.f32 %v508, %v508
        %v517 = vmul.f32 %v509, %v509
        %v518 = vmul.f32 %v510, %v510
        %v519 = vmul.f32 %v511, %v511
        %v520 = vmul.f32 %v512, %v512
        %v521 = vmul.f32 %v513, %v513
        %v522 = vmul.f32 %v514, %v514
        %523 = vadd.xlane.f32.xlu0 %v515
        %v524 = vpop.xlane.xlu0 %523
        %525 = vadd.xlane.f32.xlu0 %v516
        %v526 = vpop.xlane.xlu0 %525
        %527 = vadd.xlane.f32.xlu0 %v517
        %v528 = vpop.xlane.xlu0 %527
        %529 = vadd.xlane.f32.xlu0 %v518
        %v530 = vpop.xlane.xlu0 %529
        %531 = vadd.xlane.f32.xlu0 %v519
        %v532 = vpop.xlane.xlu0 %531
        %533 = vadd.xlane.f32.xlu0 %v520
        %v534 = vpop.xlane.xlu0 %533
        %535 = vadd.xlane.f32.xlu0 %v521
        %v536 = vpop.xlane.xlu0 %535
        %537 = vadd.xlane.f32.xlu0 %v522
        %v538 = vpop.xlane.xlu0 %537
        %v539 = vmul.f32 %v524, %v498
        %v540 = vmul.f32 %v526, %v498
        %v541 = vmul.f32 %v528, %v498
        %v542 = vmul.f32 %v530, %v498
        %v543 = vmul.f32 %v532, %v498
        %v544 = vmul.f32 %v534, %v498
        %v545 = vmul.f32 %v536, %v498
        %v546 = vmul.f32 %v538, %v498
        %v547 = vadd.f32 %v539, 1e-06
        %v548 = vadd.f32 %v540, 1e-06
        %v549 = vadd.f32 %v541, 1e-06
        %v550 = vadd.f32 %v542, 1e-06
        %v551 = vadd.f32 %v543, 1e-06
        %v552 = vadd.f32 %v544, 1e-06
        %v553 = vadd.f32 %v545, 1e-06
        %v554 = vadd.f32 %v546, 1e-06
        %v555 = vrsqrt.pop %v547
        %v556 = vrsqrt.pop %v548
        %v557 = vrsqrt.pop %v549
        %v558 = vrsqrt.pop %v550
        %v559 = vrsqrt.pop %v551
        %v560 = vrsqrt.pop %v552
        %v561 = vrsqrt.pop %v553
        %v562 = vrsqrt.pop %v554
        %v563 = vmul.f32 %v507, %v555
        %v564 = vmul.f32 %v508, %v556
        %v565 = vmul.f32 %v509, %v557
        %v566 = vmul.f32 %v510, %v558
        %v567 = vmul.f32 %v511, %v559
        %v568 = vmul.f32 %v512, %v560
        %v569 = vmul.f32 %v513, %v561
        %v570 = vmul.f32 %v514, %v562
        %v571 = vadd.f32 %v468, 1.0
        %v572 = vlaneseq
        %v573 = vshrl.u32 %v572, 7
        %v574 = vsub.s32 0, %v573
        %v575 = vrot.slane %v571, %v574
        %v576 = vmul.f32 %v563, %v575
        %v577 = vmul.f32 %v564, %v575
        %v578 = vmul.f32 %v565, %v575
        %v579 = vmul.f32 %v566, %v575
        %v580 = vmul.f32 %v567, %v575
        %v581 = vmul.f32 %v568, %v575
        %v582 = vmul.f32 %v569, %v575
        %v583 = vmul.f32 %v570, %v575
        %v584 = vlaneseq
        %v585 = vshrl.u32 %v584, 7
        %v586 = vsub.s32 0, %v585
        %v587 = vrot.slane %v470, %v586
        %v588 = vadd.f32 %v576, %v587
        %v589 = vadd.f32 %v577, %v587
        %v590 = vadd.f32 %v578, %v587
        %v591 = vadd.f32 %v579, %v587
        %v592 = vadd.f32 %v580, %v587
        %v593 = vadd.f32 %v581, %v587
        %v594 = vadd.f32 %v582, %v587
        %v595 = vadd.f32 %v583, %v587
        %v596 = vpack.c.bf16 %v589, %v588
        %v597 = vpack.c.bf16 %v591, %v590
        %v598 = vpack.c.bf16 %v593, %v592
        %v599 = vpack.c.bf16 %v595, %v594
        %v600 = vld [vmem:[#allocation7] sm:$0xf]
        %v601 = vld [vmem:[#allocation7 + $0x4] sm:$0xf]
        %v602 = vld [vmem:[#allocation7 + $0x8] sm:$0xf]
        %v603 = vld [vmem:[#allocation7 + $0xc] sm:$0xf]
        %v604 = vld [vmem:[#allocation7 + $0x10] sm:$0xf]
        %v605 = vld [vmem:[#allocation7 + $0x14] sm:$0xf]
        %v606 = vld [vmem:[#allocation7 + $0x18] sm:$0xf]
        %v607 = vld [vmem:[#allocation7 + $0x1c] sm:$0xf]
        %v608 = vld [vmem:[#allocation7 + $0x20] sm:$0xf]
        %v609 = vld [vmem:[#allocation7 + $0x24] sm:$0xf]
        %v610 = vld [vmem:[#allocation7 + $0x28] sm:$0xf]
        %v611 = vld [vmem:[#allocation7 + $0x2c] sm:$0xf]
        %v612 = vld [vmem:[#allocation7 + $0x30] sm:$0xf]
        %v613 = vld [vmem:[#allocation7 + $0x34] sm:$0xf]
        %v614 = vld [vmem:[#allocation7 + $0x38] sm:$0xf]
        %v615 = vld [vmem:[#allocation7 + $0x3c] sm:$0xf]
        %v616 = vld [vmem:[%s5] sm:$0x1]
        %v618 = vlaneseq
        %v619 = vshrl.u32 %v618, 7
        %v620 = vsub.s32 0, %v619
        %v621 = vrot.slane %v616, %v620
        %v639 = vunpack.c.l.b16 %v600
        %v640 = vunpack.c.l.b16 %v601
        %v641 = vunpack.c.l.b16 %v602
        %v642 = vunpack.c.l.b16 %v603
        %v643 = vunpack.c.l.b16 %v604
        %v644 = vunpack.c.l.b16 %v605
        %v645 = vunpack.c.l.b16 %v606
        %v646 = vunpack.c.l.b16 %v607
        %v647 = vunpack.c.l.b16 %v608
        %v648 = vunpack.c.l.b16 %v609
        %v649 = vunpack.c.l.b16 %v610
        %v650 = vunpack.c.l.b16 %v611
        %v651 = vunpack.c.l.b16 %v612
        %v652 = vunpack.c.l.b16 %v613
        %v653 = vunpack.c.l.b16 %v614
        %v654 = vunpack.c.l.b16 %v615
        %v655 = vpack.c.b16 %v640, %v639
        %v656 = vpack.c.b16 %v642, %v641
        %v657 = vpack.c.b16 %v644, %v643
        %v658 = vpack.c.b16 %v646, %v645
        %v659 = vpack.c.b16 %v648, %v647
        %v660 = vpack.c.b16 %v650, %v649
        %v661 = vpack.c.b16 %v652, %v651
        %v662 = vpack.c.b16 %v654, %v653
        %671 = vmatprep.subr.bf16.mxu0 0
        %672 = vmatpush1.bf16.msra.mxu0 %v655
        %673 = vmatprep.subr.bf16.mxu0 0
        %674 = vmatpush1.bf16.msra.mxu0 %v656
        %675 = vmatprep.subr.bf16.mxu0 0
        %676 = vmatpush1.bf16.msra.mxu0 %v657
        %677 = vmatprep.subr.bf16.mxu0 0
        %678 = vmatpush1.bf16.msra.mxu0 %v658
        %679 = vmatprep.subr.bf16.mxu0 0
        %680 = vmatpush1.bf16.msra.mxu0 %v659
        %681 = vmatprep.subr.bf16.mxu0 0
        %682 = vmatpush1.bf16.msra.mxu0 %v660
        %683 = vmatprep.subr.bf16.mxu0 0
        %684 = vmatpush1.bf16.msra.mxu0 %v661
        %685 = vmatprep.subr.bf16.mxu0 0
        %686 = vmatpush1.bf16.msra.mxu0 %v662
        %687 = vmatprep.subr.bf16.mxu0 0
        %688 = vmatpush1.bf16.msra.mxu0 0
        %689 = vmatprep.subr.bf16.mxu0 0
        %690 = vmatpush1.bf16.msra.mxu0 0
        %691 = vmatprep.subr.bf16.mxu0 0
        %692 = vmatpush1.bf16.msra.mxu0 0
        %693 = vmatprep.subr.bf16.mxu0 0
        %694 = vmatpush1.bf16.msra.mxu0 0
        %695 = vmatprep.subr.bf16.mxu0 0
        %696 = vmatpush1.bf16.msra.mxu0 0
        %697 = vmatprep.subr.bf16.mxu0 0
        %698 = vmatpush1.bf16.msra.mxu0 0
        %699 = vmatprep.subr.bf16.mxu0 0
        %700 = vmatpush1.bf16.msra.mxu0 0
        %701 = vmatprep.subr.bf16.mxu0 0
        %702 = vmatpush1.bf16.msra.mxu0 0
        %703 = vmatprep.mubr.bf16.mxu0 0
        %704 = vmatmul.mubr.bf16.gmra.mrb[0].mxu0 %v596
        %v705 = vpop.f32.mrb[0].mxu0
        %v706 = vadd.f32 %v621, %v705
        %v707 = vpop.f32.mrb[0].mxu0
        %v708 = vpop.f32.mrb[0].mxu0
        %v709 = vadd.f32 %v621, %v708
        %v710 = vpop.f32.mrb[0].mxu0
        %711 = vmatprep.mubr.bf16.mxu0 0
        %712 = vmatmul.mubr.bf16.gmra.mrb[0].mxu0 %v597
        %v713 = vpop.f32.mrb[0].mxu0
        %v714 = vadd.f32 %v621, %v713
        %v715 = vpop.f32.mrb[0].mxu0
        %v716 = vpop.f32.mrb[0].mxu0
        %v717 = vadd.f32 %v621, %v716
        %v718 = vpop.f32.mrb[0].mxu0
        %719 = vmatprep.mubr.bf16.mxu0 0
        %720 = vmatmul.mubr.bf16.gmra.mrb[0].mxu0 %v598
        %v721 = vpop.f32.mrb[0].mxu0
        %v722 = vadd.f32 %v621, %v721
        %v723 = vpop.f32.mrb[0].mxu0
        %v724 = vpop.f32.mrb[0].mxu0
        %v725 = vadd.f32 %v621, %v724
        %v726 = vpop.f32.mrb[0].mxu0
        %727 = vmatprep.mubr.bf16.mxu0 0
        %728 = vmatmul.mubr.bf16.gmra.mrb[0].mxu0 %v599
        %v729 = vpop.f32.mrb[0].mxu0
        %v730 = vadd.f32 %v621, %v729
        %v731 = vpop.f32.mrb[0].mxu0
        %v732 = vpop.f32.mrb[0].mxu0
        %v733 = vadd.f32 %v621, %v732
        %v734 = vpop.f32.mrb[0].mxu0
        %735 = vdwg.mxu0
        %736 = vst [vmem:[%s309] sm:$0xff] %v706
        %737 = vst [vmem:[%s309 + $0x8] sm:$0xff] %v709
        %738 = vst [vmem:[%s309 + $0x10] sm:$0xff] %v714
        %739 = vst [vmem:[%s309 + $0x18] sm:$0xff] %v717
        %740 = vst [vmem:[%s309 + $0x20] sm:$0xff] %v722
        %741 = vst [vmem:[%s309 + $0x28] sm:$0xff] %v725
        %742 = vst [vmem:[%s309 + $0x30] sm:$0xff] %v730
        %743 = vst [vmem:[%s309 + $0x38] sm:$0xff] %v733
        %s744 = sand.u32 %s168, 1
        %s745 = scalar_lea.sflag [#allocation4], %s744
        %s746 = sand.u32 %s168, 1
        %s747 = smul.addr %s746, 64
        %s748 = scalar_lea.vmem [#allocation8], %s747
        // Predicated region
        $region57: #{tpu_custom_call.1} parent=43 // pred_check
          %p749 = pneg %p178
        $region58: #{tpu_custom_call.1} parent=43 // pred_check_branch
          %751 = sbr.rel (%p749) target = $region60
        $region59: #{tpu_custom_call.1} parent=43 // pred_region
          %s752 = smul.u32 8, %s24
          %s754 = ssub.s32 1024, 1024
          %755 = vsyncadd %s745, %s754
          %s756 = smul.addr %s752, 128
          %s757 = scalar_lea.hbm %s6, %s756
          %s758 = sshll.u32 %s748, 4
          %s759 = int_to_ptr.vmem [resolvable:$true] %s758
          %764 = dma.vmem_to_hbm [thread:$0]  %s759, 1024, %s757, %s745, 128, 128, 8
        $region60: #{tpu_custom_call.1} parent=43 // pred_fallthru
          _
      $region44: #{tpu_custom_call.1} parent=5 // pred_fallthru
        _
      %p765 = scmp.le.s32.totalorder 2, %s19
      // Predicated region
      $region61: #{tpu_custom_call.1} parent=5 // pred_check
        %p766 = pneg %p765
      $region62: #{tpu_custom_call.1} parent=5 // pred_check_branch
        %768 = sbr.rel (%p766) target = $region64
      $region63: #{tpu_custom_call.1} parent=5 // pred_region
        %s769 = ssub.s32 %s19, 2
        // Predicated region
        $region65: #{tpu_custom_call.1} parent=63 // pred_check
          %p770 = pneg %p184
        $region66: #{tpu_custom_call.1} parent=63 // pred_check_branch
          %772 = sbr.rel (%p770) target = $region68
        $region67: #{tpu_custom_call.1} parent=63 // pred_region
          %s773 = sand.u32 %s169, 1
          %s774 = scalar_lea.sflag [#allocation4], %s773
          %s775 = sand.u32 %s169, 1
          %s776 = smul.addr %s775, 64
          %s777 = scalar_lea.vmem [#allocation8], %s776
          %778 = dma.done %s774, 1024
        $region68: #{tpu_custom_call.1} parent=63 // pred_fallthru
          _
      $region64: #{tpu_custom_call.1} parent=5 // pred_fallthru
        _
    $region6: #{tpu_custom_call.1} parent=1 // loop_footer
      %s23 = sadd.s32 1, %s19
    $region7: #{tpu_custom_call.1} parent=1 // loop_footer_branch
      %18 = sbr.rel target = $region3
    $region8: #{tpu_custom_call.1} parent=1 // loop_exit
      _
    %779 = vsyncpa [#allocation3], 1
    %s780 = scalar_lea.sflag [#allocation3], 1
    %781 = vsyncpa %s780, 1
    %782 = vsyncpa [#allocation6], 1
    %783 = vsyncpa [#allocation4], 1
    %s784 = scalar_lea.sflag [#allocation4], 1
    %785 = vsyncpa %s784, 1

</llo_original>
